<compile_context>
chip_gen: v7x
topology: tpu7x:2x2x1
jax: 0.10.0
libtpu: 0.0.40
codegen_flags: <defaults>
</compile_context>

<pallas_src>
import jax
import jax.numpy as jnp
from jax.experimental import pallas as pl
from jax.experimental.pallas import tpu as pltpu

BN_EPS = 1e-5
LANE = 128


def _make_decoder_kernel(latent_dim):
    """Returns the whole-decoder kernel specialized to a static latent width."""

    def kernel(x_ref, w_ref, v_ref, o_ref):
        # x_ref: (B, latent_dim)  natural-width latent input
        # w_ref: (4, D, D)        zero-padded weight tiles (in, out)
        # v_ref: (8, D)           [g1, be1, g2, be2, g3, be3, final_bias, 0]
        # o_ref: (B, D)           lane-padded output
        inv_b = 1.0 / x_ref.shape[0]  # static batch size

        def bn_relu(y, li):
            # One-pass batch statistics: two independent XLU reductions.
            s1 = jnp.sum(y, axis=0, keepdims=True)
            s2 = jnp.sum(y * y, axis=0, keepdims=True)
            mean = s1 * inv_b
            # Biased variance (PyTorch training-mode BN); clamp guards the
            # f32 cancellation of E[y^2] - mean^2 in padded / degenerate lanes.
            var = jnp.maximum(s2 * inv_b - mean * mean, 0.0)
            # Folded affine: per-column scale/shift on tiny (1, D) vectors.
            scale = v_ref[pl.ds(2 * li, 1), :] * jax.lax.rsqrt(var + BN_EPS)
            shift = v_ref[pl.ds(2 * li + 1, 1), :] - mean * scale
            # 3-op per-element chain: mul, add, max (ReLU).
            return jnp.maximum(y * scale + shift, 0.0)

        # Layer 1: contract the natural-width latent against a static,
        # sublane-aligned row slice of the first padded weight tile.
        h = bn_relu(
            jnp.dot(
                x_ref[...],
                w_ref[0, pl.ds(0, latent_dim), :],
                preferred_element_type=jnp.float32,
            ),
            0,
        )
        # Layers 2 and 3: full (D, D) lane-dense tiles.
        h = bn_relu(jnp.dot(h, w_ref[1], preferred_element_type=jnp.float32), 1)
        h = bn_relu(jnp.dot(h, w_ref[2], preferred_element_type=jnp.float32), 2)

        # Final Linear (bias kept: no BatchNorm after it, no activation).
        o_ref[...] = (
            jnp.dot(h, w_ref[3], preferred_element_type=jnp.float32)
            + v_ref[pl.ds(6, 1), :]
        )

    return kernel


def pack_decoder_params(weights, gammas, betas, final_bias):
    """Pack all decoder parameters into two lane-dense slabs.

    weights:    list of 4 arrays, each (d_in, d_out)   (PyTorch weights would
                be transposed from (out, in) when importing)
    gammas,
    betas:      3 arrays each, shape (features,)       (BatchNorm affine)
    final_bias: (input_dim,)                           (bias of the last Linear)

    All padding regions are exactly zero; keep them exactly zero after any
    dtype conversion (padded-lane correctness relies on it).
    """
    d_raw = max(max(w.shape) for w in weights)
    D = ((d_raw + LANE - 1) // LANE) * LANE  # pad common width to 128 lanes

    w_slab = jnp.zeros((4, D, D), jnp.float32)
    for i, w in enumerate(weights):
        w_slab = w_slab.at[i, : w.shape[0], : w.shape[1]].set(
            jnp.asarray(w, jnp.float32)
        )

    v_slab = jnp.zeros((8, D), jnp.float32)
    for i, (g, b) in enumerate(zip(gammas, betas)):
        v_slab = v_slab.at[2 * i, : g.shape[0]].set(jnp.asarray(g, jnp.float32))
        v_slab = v_slab.at[2 * i + 1, : b.shape[0]].set(jnp.asarray(b, jnp.float32))
    v_slab = v_slab.at[6, : final_bias.shape[0]].set(
        jnp.asarray(final_bias, jnp.float32)
    )
    return w_slab, v_slab


def decoder_forward(latent_z, w_slab, v_slab, input_dim, *, slice_output=True):
    """Runs the decoder forward pass in a single Pallas kernel.

    latent_z is passed at its natural (B, latent_dim) shape (no wrapper pad).
    """
    B, latent_dim = latent_z.shape
    D = w_slab.shape[-1]

    vmem = pl.BlockSpec(memory_space=pltpu.MemorySpace.VMEM)

    # Advisory cost hint so XLA can overlap the custom call with neighbors.
    flops = 2 * B * D * (latent_dim + 3 * D)
    bytes_accessed = 4 * (latent_z.size + w_slab.size + v_slab.size + B * D)
    cost = pl.CostEstimate(
        flops=flops, transcendentals=3 * D, bytes_accessed=bytes_accessed
    )

    out = pl.pallas_call(
        _make_decoder_kernel(latent_dim),
        out_shape=jax.ShapeDtypeStruct((B, D), jnp.float32),
        in_specs=[vmem, vmem, vmem],
        out_specs=vmem,
        cost_estimate=cost,
    )(jnp.asarray(latent_z, jnp.float32), w_slab, v_slab)

    return out[:, :input_dim] if slice_output else out


if __name__ == "__main__":
    # Small shapes consistent with decoder(latent_dim, input_dim, hidden_dim).
    B = 8
    latent_dim = 16
    input_dim = 24
    hidden_dim = [64, 48, 32]  # layers: latent -> h[2] -> h[1] -> h[0] -> input

    dims = [latent_dim, hidden_dim[2], hidden_dim[1], hidden_dim[0], input_dim]

    key = jax.random.PRNGKey(0)
    keys = jax.random.split(key, 32)
    ki = 0

    weights, biases, gammas, betas = [], [], [], []
    for d_in, d_out in zip(dims[:-1], dims[1:]):
        weights.append(jax.random.normal(keys[ki], (d_in, d_out), jnp.float32) * 0.1); ki += 1
        biases.append(jax.random.normal(keys[ki], (d_out,), jnp.float32) * 0.05);      ki += 1
    for d_out in dims[1:-1]:  # BatchNorm affine for the 3 hidden layers
        gammas.append(1.0 + jax.random.normal(keys[ki], (d_out,), jnp.float32) * 0.05); ki += 1
        betas.append(jax.random.normal(keys[ki], (d_out,), jnp.float32) * 0.05);        ki += 1
    final_bias = biases[3]

    latent_z = jax.random.normal(keys[ki], (B, latent_dim), jnp.float32); ki += 1

    w_slab, v_slab = pack_decoder_params(weights, gammas, betas, final_bias)
    out = decoder_forward(latent_z, w_slab, v_slab, input_dim)
    jax.block_until_ready(out)

    # Pure-JAX reference with the exact PyTorch math (including the pre-BN
    # Linear biases that the kernel drops and the two-pass biased variance).
    def ref_forward(x):
        h = x
        for li in range(3):
            y = h @ weights[li] + biases[li]
            mean = jnp.mean(y, axis=0, keepdims=True)
            var = jnp.mean((y - mean) ** 2, axis=0, keepdims=True)
            h = jnp.maximum(
                (y - mean) / jnp.sqrt(var + BN_EPS) * gammas[li] + betas[li], 0.0
            )
        return h @ weights[3] + final_bias

    ref = ref_forward(latent_z)
    assert out.shape == (B, input_dim)
    assert jnp.allclose(out, ref, atol=1e-4, rtol=1e-4), \
        f"max abs err {jnp.max(jnp.abs(out - ref))}"

    print("KERNEL_OK")
</pallas_src>

<mosaic_0001>
module attributes {stable_mosaic.version = 11 : i64} {
  func.func @kernel(%arg0: memref<8x16xf32, #tpu.memory_space<vmem>>, %arg1: memref<4x128x128xf32, #tpu.memory_space<vmem>>, %arg2: memref<8x128xf32, #tpu.memory_space<vmem>>, %arg3: memref<8x128xf32, #tpu.memory_space<vmem>>) attributes {dimension_semantics = [], scalar_prefetch = 0 : i64, scratch_operands = 0 : i64, tpu.core_type = #tpu.core_type<tc>} {
    %c0 = arith.constant 0 : index
    %c0_0 = arith.constant 0 : index
    %0 = vector.load %arg0[%c0, %c0_0] : memref<8x16xf32, #tpu.memory_space<vmem>>, vector<8x16xf32>
    %c0_1 = arith.constant 0 : index
    %c0_2 = arith.constant 0 : index
    %c0_3 = arith.constant 0 : index
    %1 = vector.load %arg1[%c0_1, %c0_2, %c0_3] : memref<4x128x128xf32, #tpu.memory_space<vmem>>, vector<1x16x128xf32>
    %2 = vector.shape_cast %1 : vector<1x16x128xf32> to vector<16x128xf32>
    %cst = arith.constant dense<0.000000e+00> : vector<8x128xf32>
    %3 = tpu.matmul %0, %2, %cst {dimension_numbers = #tpu.dot_dimension_numbers<[1], [0], [0], [1], [0, 0, 1, 1], [], []>} : vector<8x16xf32>, vector<16x128xf32>, vector<8x128xf32> -> vector<8x128xf32>
    %cst_4 = arith.constant dense<0.000000e+00> : vector<128xf32>
    %4 = vector.multi_reduction <add>, %3, %cst_4 [0] : vector<8x128xf32> to vector<128xf32>
    %5 = vector.shape_cast %4 : vector<128xf32> to vector<1x128xf32>
    %6 = arith.mulf %3, %3 : vector<8x128xf32>
    %cst_5 = arith.constant dense<0.000000e+00> : vector<128xf32>
    %7 = vector.multi_reduction <add>, %6, %cst_5 [0] : vector<8x128xf32> to vector<128xf32>
    %8 = vector.shape_cast %7 : vector<128xf32> to vector<1x128xf32>
    %cst_6 = arith.constant 1.250000e-01 : f32
    %9 = vector.broadcast %cst_6 : f32 to vector<1x128xf32>
    %10 = arith.mulf %5, %9 : vector<1x128xf32>
    %cst_7 = arith.constant 1.250000e-01 : f32
    %11 = vector.broadcast %cst_7 : f32 to vector<1x128xf32>
    %12 = arith.mulf %8, %11 : vector<1x128xf32>
    %13 = arith.mulf %10, %10 : vector<1x128xf32>
    %14 = arith.subf %12, %13 : vector<1x128xf32>
    %cst_8 = arith.constant 0.000000e+00 : f32
    %15 = vector.broadcast %cst_8 : f32 to vector<1x128xf32>
    %16 = arith.maximumf %14, %15 : vector<1x128xf32>
    %c0_9 = arith.constant 0 : index
    %c0_10 = arith.constant 0 : index
    %17 = vector.load %arg2[%c0_9, %c0_10] : memref<8x128xf32, #tpu.memory_space<vmem>>, vector<1x128xf32>
    %cst_11 = arith.constant 9.99999974E-6 : f32
    %18 = vector.broadcast %cst_11 : f32 to vector<1x128xf32>
    %19 = arith.addf %16, %18 : vector<1x128xf32>
    %20 = math.rsqrt %19 : vector<1x128xf32>
    %21 = arith.mulf %17, %20 : vector<1x128xf32>
    %c1 = arith.constant 1 : index
    %c0_12 = arith.constant 0 : index
    %22 = vector.load %arg2[%c1, %c0_12] : memref<8x128xf32, #tpu.memory_space<vmem>>, vector<1x128xf32>
    %23 = arith.mulf %10, %21 : vector<1x128xf32>
    %24 = arith.subf %22, %23 : vector<1x128xf32>
    %25 = vector.broadcast %21 : vector<1x128xf32> to vector<8x128xf32>
    %26 = arith.mulf %3, %25 : vector<8x128xf32>
    %27 = vector.broadcast %24 : vector<1x128xf32> to vector<8x128xf32>
    %28 = arith.addf %26, %27 : vector<8x128xf32>
    %cst_13 = arith.constant 0.000000e+00 : f32
    %29 = vector.broadcast %cst_13 : f32 to vector<8x128xf32>
    %30 = arith.maximumf %28, %29 : vector<8x128xf32>
    %c1_14 = arith.constant 1 : index
    %c0_15 = arith.constant 0 : index
    %c0_16 = arith.constant 0 : index
    %31 = vector.load %arg1[%c1_14, %c0_15, %c0_16] : memref<4x128x128xf32, #tpu.memory_space<vmem>>, vector<1x128x128xf32>
    %32 = vector.shape_cast %31 : vector<1x128x128xf32> to vector<128x128xf32>
    %cst_17 = arith.constant dense<0.000000e+00> : vector<8x128xf32>
    %33 = tpu.matmul %30, %32, %cst_17 {dimension_numbers = #tpu.dot_dimension_numbers<[1], [0], [0], [1], [0, 0, 1, 1], [], []>} : vector<8x128xf32>, vector<128x128xf32>, vector<8x128xf32> -> vector<8x128xf32>
    %cst_18 = arith.constant dense<0.000000e+00> : vector<128xf32>
    %34 = vector.multi_reduction <add>, %33, %cst_18 [0] : vector<8x128xf32> to vector<128xf32>
    %35 = vector.shape_cast %34 : vector<128xf32> to vector<1x128xf32>
    %36 = arith.mulf %33, %33 : vector<8x128xf32>
    %cst_19 = arith.constant dense<0.000000e+00> : vector<128xf32>
    %37 = vector.multi_reduction <add>, %36, %cst_19 [0] : vector<8x128xf32> to vector<128xf32>
    %38 = vector.shape_cast %37 : vector<128xf32> to vector<1x128xf32>
    %cst_20 = arith.constant 1.250000e-01 : f32
    %39 = vector.broadcast %cst_20 : f32 to vector<1x128xf32>
    %40 = arith.mulf %35, %39 : vector<1x128xf32>
    %cst_21 = arith.constant 1.250000e-01 : f32
    %41 = vector.broadcast %cst_21 : f32 to vector<1x128xf32>
    %42 = arith.mulf %38, %41 : vector<1x128xf32>
    %43 = arith.mulf %40, %40 : vector<1x128xf32>
    %44 = arith.subf %42, %43 : vector<1x128xf32>
    %cst_22 = arith.constant 0.000000e+00 : f32
    %45 = vector.broadcast %cst_22 : f32 to vector<1x128xf32>
    %46 = arith.maximumf %44, %45 : vector<1x128xf32>
    %c2 = arith.constant 2 : index
    %c0_23 = arith.constant 0 : index
    %47 = vector.load %arg2[%c2, %c0_23] : memref<8x128xf32, #tpu.memory_space<vmem>>, vector<1x128xf32>
    %cst_24 = arith.constant 9.99999974E-6 : f32
    %48 = vector.broadcast %cst_24 : f32 to vector<1x128xf32>
    %49 = arith.addf %46, %48 : vector<1x128xf32>
    %50 = math.rsqrt %49 : vector<1x128xf32>
    %51 = arith.mulf %47, %50 : vector<1x128xf32>
    %c3 = arith.constant 3 : index
    %c0_25 = arith.constant 0 : index
    %52 = vector.load %arg2[%c3, %c0_25] : memref<8x128xf32, #tpu.memory_space<vmem>>, vector<1x128xf32>
    %53 = arith.mulf %40, %51 : vector<1x128xf32>
    %54 = arith.subf %52, %53 : vector<1x128xf32>
    %55 = vector.broadcast %51 : vector<1x128xf32> to vector<8x128xf32>
    %56 = arith.mulf %33, %55 : vector<8x128xf32>
    %57 = vector.broadcast %54 : vector<1x128xf32> to vector<8x128xf32>
    %58 = arith.addf %56, %57 : vector<8x128xf32>
    %cst_26 = arith.constant 0.000000e+00 : f32
    %59 = vector.broadcast %cst_26 : f32 to vector<8x128xf32>
    %60 = arith.maximumf %58, %59 : vector<8x128xf32>
    %c2_27 = arith.constant 2 : index
    %c0_28 = arith.constant 0 : index
    %c0_29 = arith.constant 0 : index
    %61 = vector.load %arg1[%c2_27, %c0_28, %c0_29] : memref<4x128x128xf32, #tpu.memory_space<vmem>>, vector<1x128x128xf32>
    %62 = vector.shape_cast %61 : vector<1x128x128xf32> to vector<128x128xf32>
    %cst_30 = arith.constant dense<0.000000e+00> : vector<8x128xf32>
    %63 = tpu.matmul %60, %62, %cst_30 {dimension_numbers = #tpu.dot_dimension_numbers<[1], [0], [0], [1], [0, 0, 1, 1], [], []>} : vector<8x128xf32>, vector<128x128xf32>, vector<8x128xf32> -> vector<8x128xf32>
    %cst_31 = arith.constant dense<0.000000e+00> : vector<128xf32>
    %64 = vector.multi_reduction <add>, %63, %cst_31 [0] : vector<8x128xf32> to vector<128xf32>
    %65 = vector.shape_cast %64 : vector<128xf32> to vector<1x128xf32>
    %66 = arith.mulf %63, %63 : vector<8x128xf32>
    %cst_32 = arith.constant dense<0.000000e+00> : vector<128xf32>
    %67 = vector.multi_reduction <add>, %66, %cst_32 [0] : vector<8x128xf32> to vector<128xf32>
    %68 = vector.shape_cast %67 : vector<128xf32> to vector<1x128xf32>
    %cst_33 = arith.constant 1.250000e-01 : f32
    %69 = vector.broadcast %cst_33 : f32 to vector<1x128xf32>
    %70 = arith.mulf %65, %69 : vector<1x128xf32>
    %cst_34 = arith.constant 1.250000e-01 : f32
    %71 = vector.broadcast %cst_34 : f32 to vector<1x128xf32>
    %72 = arith.mulf %68, %71 : vector<1x128xf32>
    %73 = arith.mulf %70, %70 : vector<1x128xf32>
    %74 = arith.subf %72, %73 : vector<1x128xf32>
    %cst_35 = arith.constant 0.000000e+00 : f32
    %75 = vector.broadcast %cst_35 : f32 to vector<1x128xf32>
    %76 = arith.maximumf %74, %75 : vector<1x128xf32>
    %c4 = arith.constant 4 : index
    %c0_36 = arith.constant 0 : index
    %77 = vector.load %arg2[%c4, %c0_36] : memref<8x128xf32, #tpu.memory_space<vmem>>, vector<1x128xf32>
    %cst_37 = arith.constant 9.99999974E-6 : f32
    %78 = vector.broadcast %cst_37 : f32 to vector<1x128xf32>
    %79 = arith.addf %76, %78 : vector<1x128xf32>
    %80 = math.rsqrt %79 : vector<1x128xf32>
    %81 = arith.mulf %77, %80 : vector<1x128xf32>
    %c5 = arith.constant 5 : index
    %c0_38 = arith.constant 0 : index
    %82 = vector.load %arg2[%c5, %c0_38] : memref<8x128xf32, #tpu.memory_space<vmem>>, vector<1x128xf32>
    %83 = arith.mulf %70, %81 : vector<1x128xf32>
    %84 = arith.subf %82, %83 : vector<1x128xf32>
    %85 = vector.broadcast %81 : vector<1x128xf32> to vector<8x128xf32>
    %86 = arith.mulf %63, %85 : vector<8x128xf32>
    %87 = vector.broadcast %84 : vector<1x128xf32> to vector<8x128xf32>
    %88 = arith.addf %86, %87 : vector<8x128xf32>
    %cst_39 = arith.constant 0.000000e+00 : f32
    %89 = vector.broadcast %cst_39 : f32 to vector<8x128xf32>
    %90 = arith.maximumf %88, %89 : vector<8x128xf32>
    %c3_40 = arith.constant 3 : index
    %c0_41 = arith.constant 0 : index
    %c0_42 = arith.constant 0 : index
    %91 = vector.load %arg1[%c3_40, %c0_41, %c0_42] : memref<4x128x128xf32, #tpu.memory_space<vmem>>, vector<1x128x128xf32>
    %92 = vector.shape_cast %91 : vector<1x128x128xf32> to vector<128x128xf32>
    %cst_43 = arith.constant dense<0.000000e+00> : vector<8x128xf32>
    %93 = tpu.matmul %90, %92, %cst_43 {dimension_numbers = #tpu.dot_dimension_numbers<[1], [0], [0], [1], [0, 0, 1, 1], [], []>} : vector<8x128xf32>, vector<128x128xf32>, vector<8x128xf32> -> vector<8x128xf32>
    %c6 = arith.constant 6 : index
    %c0_44 = arith.constant 0 : index
    %94 = vector.load %arg2[%c6, %c0_44] : memref<8x128xf32, #tpu.memory_space<vmem>>, vector<1x128xf32>
    %95 = vector.broadcast %94 : vector<1x128xf32> to vector<8x128xf32>
    %96 = arith.addf %93, %95 : vector<8x128xf32>
    %c0_45 = arith.constant 0 : index
    %c0_46 = arith.constant 0 : index
    %97 = vector.load %arg3[%c0_45, %c0_46] : memref<8x128xf32, #tpu.memory_space<vmem>>, vector<8x128xf32>
    tpu.vector_store %arg3[%c0_45, %c0_46], %96 {strides = array<i32>} : memref<8x128xf32, #tpu.memory_space<vmem>>, vector<8x128xf32>,
    return
  }
}

</mosaic_0001>

<llo_original>
// kernel: tpu_custom_call.1
$region0: #{tpu_custom_call.1}
  #allocation0 [shape = 'u32[]', space=smem, size = 0x4, offset = 0x4, fixed_abs, tag = 'smem constant byte address 0x4 - core index']
  #allocation1 [shape = 'u32[144,128]{1,0:T(1,128)}', space=vmem, size = 0x12000, scoped, tag = 'internal scratch']
  %s0 = inlined_call_operand.hbm [shape: f32[8,16], index: 0, kind: input, shape index: {}]
  %s1 = inlined_call_operand.hbm [shape: f32[4,128,128], index: 1, kind: input, shape index: {}]
  %s2 = inlined_call_operand.hbm [shape: f32[8,128], index: 2, kind: input, shape index: {}]
  %s3 = inlined_call_operand.hbm [shape: f32[8,128], index: 3, kind: output, shape index: {}]
  %s4 = sld [smem:[#allocation0]]
  $region34: #{tpu_custom_call.1} parent=0
    _
  %s6 = ssub.s32 1, %s4
  %s7 = scalar_select 0, %s6, %s4
  $region1: #{tpu_custom_call.1} parent=0
    #allocation2 [shape = 'u8[4096]{0}', space=vmem, size = 0x1000, scoped, tag = 'input window, operand 0, single buffered']
    #allocation3 [shape = 's32[1]{0}', space=sflag, size = 0x4, scoped, tag = 'scoped memory for tpu_custom_call.1']
    #allocation4 [shape = 's32[1]{0}', space=sflag, size = 0x4, scoped, tag = 'scoped memory for tpu_custom_call.1']
    #allocation5 [shape = 'u8[262144]{0}', space=vmem, size = 0x40000, scoped, tag = 'input window, operand 1, single buffered']
    #allocation6 [shape = 's32[1]{0}', space=sflag, size = 0x4, scoped, tag = 'scoped memory for tpu_custom_call.1']
    #allocation7 [shape = 'u8[4096]{0}', space=vmem, size = 0x1000, scoped, tag = 'input window, operand 2, single buffered']
    #allocation8 [shape = 'u8[4096]{0}', space=vmem, size = 0x1000, scoped, tag = 'output window, operand 0, single buffered']
    %8 = vsyncpa [#allocation3], 0
    %9 = vsyncpa [#allocation6], 0
    %10 = vsyncpa [#allocation4], 0
    // Predicated region
    $region2: #{tpu_custom_call.1} parent=1 // pred_check
      _
    $region3: #{tpu_custom_call.1} parent=1 // pred_check_branch
      %12 = sbr.rel (0) target = $region5
    $region4: #{tpu_custom_call.1} parent=1 // pred_region
      %s14 = ssub.s32 128, 128
      %15 = vsyncadd [#allocation3], %s14
      %s17 = sshll.u32 [#allocation2], 4
      %s18 = int_to_ptr.vmem [resolvable:$true] %s17
      %20 = dma.hbm_to_vmem [thread:$0]  %s0, 128, %s18, [#allocation3]
    $region5: #{tpu_custom_call.1} parent=1 // pred_fallthru
      _
    // Predicated region
    $region6: #{tpu_custom_call.1} parent=1 // pred_check
      _
    $region7: #{tpu_custom_call.1} parent=1 // pred_check_branch
      %22 = sbr.rel (0) target = $region9
    $region8: #{tpu_custom_call.1} parent=1 // pred_region
      %s24 = ssub.s32 8192, 8192
      %25 = vsyncadd [#allocation6], %s24
      %s26 = sshll.u32 [#allocation5], 4
      %s27 = int_to_ptr.vmem [resolvable:$true] %s26
      %32 = dma.hbm_to_vmem [thread:$0]  %s1, 8192, %s27, [#allocation6], 128, 128, 8
    $region9: #{tpu_custom_call.1} parent=1 // pred_fallthru
      _
    // Predicated region
    $region10: #{tpu_custom_call.1} parent=1 // pred_check
      _
    $region11: #{tpu_custom_call.1} parent=1 // pred_check_branch
      %34 = sbr.rel (0) target = $region13
    $region12: #{tpu_custom_call.1} parent=1 // pred_region
      %s36 = ssub.s32 128, 128
      %37 = vsyncadd [#allocation6], %s36
      %s39 = sshll.u32 [#allocation7], 4
      %s40 = int_to_ptr.vmem [resolvable:$true] %s39
      %42 = dma.hbm_to_vmem [thread:$0]  %s2, 128, %s40, [#allocation6]
    $region13: #{tpu_custom_call.1} parent=1 // pred_fallthru
      _
    // Predicated region
    $region14: #{tpu_custom_call.1} parent=1 // pred_check
      _
    $region15: #{tpu_custom_call.1} parent=1 // pred_check_branch
      %44 = sbr.rel (0) target = $region17
    $region16: #{tpu_custom_call.1} parent=1 // pred_region
      %45 = dma.done [#allocation3], 128
    $region17: #{tpu_custom_call.1} parent=1 // pred_fallthru
      _
    // Predicated region
    $region18: #{tpu_custom_call.1} parent=1 // pred_check
      _
    $region19: #{tpu_custom_call.1} parent=1 // pred_check_branch
      %47 = sbr.rel (0) target = $region21
    $region20: #{tpu_custom_call.1} parent=1 // pred_region
      %48 = dma.done [#allocation6], 8192
    $region21: #{tpu_custom_call.1} parent=1 // pred_fallthru
      _
    // Predicated region
    $region22: #{tpu_custom_call.1} parent=1 // pred_check
      _
    $region23: #{tpu_custom_call.1} parent=1 // pred_check_branch
      %50 = sbr.rel (0) target = $region25
    $region24: #{tpu_custom_call.1} parent=1 // pred_region
      %51 = dma.done [#allocation6], 128
    $region25: #{tpu_custom_call.1} parent=1 // pred_fallthru
      _
    %v52 = vld [vmem:[#allocation2] sm:$0xff]
    %v53 = vld [vmem:[#allocation5] sm:$0xff]
    %v54 = vld [vmem:[#allocation5 + $0x8] sm:$0xff]
    %vm55 = vcmask 130048
    %v57 = vsel %vm55, %v52, 0
    %59 = vmatprep.subr.mxu0 0.0
    %60 = vmatpush1.msra.mxu0 %v53
    %61 = vmatprep.subr.mxu0 0.0
    %62 = vmatpush1.msra.mxu0 %v54
    %63 = vmatprep.subr.mxu0 0.0
    %64 = vmatpush1.msra.mxu0 0.0
    %65 = vmatprep.subr.mxu0 0.0
    %66 = vmatpush1.msra.mxu0 0.0
    %67 = vmatprep.subr.mxu0 0.0
    %68 = vmatpush1.msra.mxu0 0.0
    %69 = vmatprep.subr.mxu0 0.0
    %70 = vmatpush1.msra.mxu0 0.0
    %71 = vmatprep.subr.mxu0 0.0
    %72 = vmatpush1.msra.mxu0 0.0
    %73 = vmatprep.subr.mxu0 0.0
    %74 = vmatpush1.msra.mxu0 0.0
    %75 = vmatprep.subr.mxu0 0.0
    %76 = vmatpush1.msra.mxu0 0.0
    %77 = vmatprep.subr.mxu0 0.0
    %78 = vmatpush1.msra.mxu0 0.0
    %79 = vmatprep.subr.mxu0 0.0
    %80 = vmatpush1.msra.mxu0 0.0
    %81 = vmatprep.subr.mxu0 0.0
    %82 = vmatpush1.msra.mxu0 0.0
    %83 = vmatprep.subr.mxu0 0.0
    %84 = vmatpush1.msra.mxu0 0.0
    %85 = vmatprep.subr.mxu0 0.0
    %86 = vmatpush1.msra.mxu0 0.0
    %87 = vmatprep.subr.mxu0 0.0
    %88 = vmatpush1.msra.mxu0 0.0
    %89 = vmatprep.subr.mxu0 0.0
    %90 = vmatpush1.msra.mxu0 0.0
    %91 = vmatprep.subr.mxu0 0.0
    %92 = vmatpush1.msra.mxu0 0.0
    %93 = vmatprep.subr.mxu0 0.0
    %94 = vmatpush1.msra.mxu0 0.0
    %95 = vmatprep.subr.mxu0 0.0
    %96 = vmatpush1.msra.mxu0 0.0
    %97 = vmatprep.subr.mxu0 0.0
    %98 = vmatpush1.msra.mxu0 0.0
    %99 = vmatprep.subr.mxu0 0.0
    %100 = vmatpush1.msra.mxu0 0.0
    %101 = vmatprep.subr.mxu0 0.0
    %102 = vmatpush1.msra.mxu0 0.0
    %103 = vmatprep.subr.mxu0 0.0
    %104 = vmatpush1.msra.mxu0 0.0
    %105 = vmatprep.subr.mxu0 0.0
    %106 = vmatpush1.msra.mxu0 0.0
    %107 = vmatprep.subr.mxu0 0.0
    %108 = vmatpush1.msra.mxu0 0.0
    %109 = vmatprep.subr.mxu0 0.0
    %110 = vmatpush1.msra.mxu0 0.0
    %111 = vmatprep.subr.mxu0 0.0
    %112 = vmatpush1.msra.mxu0 0.0
    %113 = vmatprep.subr.mxu0 0.0
    %114 = vmatpush1.msra.mxu0 0.0
    %115 = vmatprep.subr.mxu0 0.0
    %116 = vmatpush1.msra.mxu0 0.0
    %117 = vmatprep.subr.mxu0 0.0
    %118 = vmatpush1.msra.mxu0 0.0
    %119 = vmatprep.subr.mxu0 0.0
    %120 = vmatpush1.msra.mxu0 0.0
    %121 = vmatprep.subr.mxu0 0.0
    %122 = vmatpush1.msra.mxu0 0.0
    %123 = vmatprep.mubr.f32.mxu0 0.0
    %124 = vmatmul.mubr.f32.gmra.mrb[0].mxu0 %v57
    %v125 = vpop.f32.mrb[0].mxu0
    %v126 = vadd.f32 0.0, %v125
    %v127 = vpop.f32.mrb[0].mxu0
    %128 = vdwg.mxu0
    %v129 = vrot.slane %v126, 4
    %v130 = vadd.f32 %v126, %v129
    %v131 = vrot.slane %v130, 2
    %v132 = vadd.f32 %v130, %v131
    %v133 = vrot.slane %v132, 1
    %v134 = vadd.f32 %v132, %v133
    %v135 = vmul.f32 %v126, %v126
    %v136 = vrot.slane %v135, 4
    %v137 = vadd.f32 %v135, %v136
    %v138 = vrot.slane %v137, 2
    %v139 = vadd.f32 %v137, %v138
    %v140 = vrot.slane %v139, 1
    %v141 = vadd.f32 %v139, %v140
    %v142 = vmul.f32 %v134, 0.125
    %v143 = vmul.f32 %v141, 0.125
    %v144 = vmul.f32 %v142, %v142
    %v145 = vsub.f32 %v143, %v144
    %v146 = vmax.f32 %v145, 0.0
    %v147 = vld [vmem:[#allocation7] sm:$0x1]
    %v148 = vadd.f32 %v146, 1e-05
    %v149 = vrsqrt.pop %v148
    %v150 = vmul.f32 %v147, %v149
    %v151 = vld [vmem:[#allocation7 + $0x1] sm:$0x1]
    %v152 = vmul.f32 %v142, %v150
    %v153 = vsub.f32 %v151, %v152
    %v154 = vlaneseq
    %v155 = vshrl.u32 %v154, 7
    %v156 = vsub.s32 0, %v155
    %v157 = vrot.slane %v150, %v156
    %v158 = vmul.f32 %v126, %v157
    %v159 = vlaneseq
    %v160 = vshrl.u32 %v159, 7
    %v161 = vsub.s32 0, %v160
    %v162 = vrot.slane %v153, %v161
    %v163 = vadd.f32 %v158, %v162
    %v164 = vmax.f32 %v163, 0.0
    %s165 = scalar_lea.vmem [#allocation5], 128
    %v166 = vld [vmem:[%s165] sm:$0xff]
    %v167 = vld [vmem:[%s165 + $0x8] sm:$0xff]
    %v168 = vld [vmem:[%s165 + $0x10] sm:$0xff]
    %v169 = vld [vmem:[%s165 + $0x18] sm:$0xff]
    %v170 = vld [vmem:[%s165 + $0x20] sm:$0xff]
    %v171 = vld [vmem:[%s165 + $0x28] sm:$0xff]
    %v172 = vld [vmem:[%s165 + $0x30] sm:$0xff]
    %v173 = vld [vmem:[%s165 + $0x38] sm:$0xff]
    %v174 = vld [vmem:[%s165 + $0x40] sm:$0xff]
    %v175 = vld [vmem:[%s165 + $0x48] sm:$0xff]
    %v176 = vld [vmem:[%s165 + $0x50] sm:$0xff]
    %v177 = vld [vmem:[%s165 + $0x58] sm:$0xff]
    %v178 = vld [vmem:[%s165 + $0x60] sm:$0xff]
    %v179 = vld [vmem:[%s165 + $0x68] sm:$0xff]
    %v180 = vld [vmem:[%s165 + $0x70] sm:$0xff]
    %v181 = vld [vmem:[%s165 + $0x78] sm:$0xff]
    %182 = vmatprep.subr.mxu0 0.0
    %183 = vmatpush1.msra.mxu0 %v166
    %184 = vmatprep.subr.mxu0 0.0
    %185 = vmatpush1.msra.mxu0 %v167
    %186 = vmatprep.subr.mxu0 0.0
    %187 = vmatpush1.msra.mxu0 %v168
    %188 = vmatprep.subr.mxu0 0.0
    %189 = vmatpush1.msra.mxu0 %v169
    %190 = vmatprep.subr.mxu0 0.0
    %191 = vmatpush1.msra.mxu0 %v170
    %192 = vmatprep.subr.mxu0 0.0
    %193 = vmatpush1.msra.mxu0 %v171
    %194 = vmatprep.subr.mxu0 0.0
    %195 = vmatpush1.msra.mxu0 %v172
    %196 = vmatprep.subr.mxu0 0.0
    %197 = vmatpush1.msra.mxu0 %v173
    %198 = vmatprep.subr.mxu0 0.0
    %199 = vmatpush1.msra.mxu0 %v174
    %200 = vmatprep.subr.mxu0 0.0
    %201 = vmatpush1.msra.mxu0 %v175
    %202 = vmatprep.subr.mxu0 0.0
    %203 = vmatpush1.msra.mxu0 %v176
    %204 = vmatprep.subr.mxu0 0.0
    %205 = vmatpush1.msra.mxu0 %v177
    %206 = vmatprep.subr.mxu0 0.0
    %207 = vmatpush1.msra.mxu0 %v178
    %208 = vmatprep.subr.mxu0 0.0
    %209 = vmatpush1.msra.mxu0 %v179
    %210 = vmatprep.subr.mxu0 0.0
    %211 = vmatpush1.msra.mxu0 %v180
    %212 = vmatprep.subr.mxu0 0.0
    %213 = vmatpush1.msra.mxu0 %v181
    %214 = vmatprep.subr.mxu0 0.0
    %215 = vmatpush1.msra.mxu0 0.0
    %216 = vmatprep.subr.mxu0 0.0
    %217 = vmatpush1.msra.mxu0 0.0
    %218 = vmatprep.subr.mxu0 0.0
    %219 = vmatpush1.msra.mxu0 0.0
    %220 = vmatprep.subr.mxu0 0.0
    %221 = vmatpush1.msra.mxu0 0.0
    %222 = vmatprep.subr.mxu0 0.0
    %223 = vmatpush1.msra.mxu0 0.0
    %224 = vmatprep.subr.mxu0 0.0
    %225 = vmatpush1.msra.mxu0 0.0
    %226 = vmatprep.subr.mxu0 0.0
    %227 = vmatpush1.msra.mxu0 0.0
    %228 = vmatprep.subr.mxu0 0.0
    %229 = vmatpush1.msra.mxu0 0.0
    %230 = vmatprep.subr.mxu0 0.0
    %231 = vmatpush1.msra.mxu0 0.0
    %232 = vmatprep.subr.mxu0 0.0
    %233 = vmatpush1.msra.mxu0 0.0
    %234 = vmatprep.subr.mxu0 0.0
    %235 = vmatpush1.msra.mxu0 0.0
    %236 = vmatprep.subr.mxu0 0.0
    %237 = vmatpush1.msra.mxu0 0.0
    %238 = vmatprep.subr.mxu0 0.0
    %239 = vmatpush1.msra.mxu0 0.0
    %240 = vmatprep.subr.mxu0 0.0
    %241 = vmatpush1.msra.mxu0 0.0
    %242 = vmatprep.subr.mxu0 0.0
    %243 = vmatpush1.msra.mxu0 0.0
    %244 = vmatprep.subr.mxu0 0.0
    %245 = vmatpush1.msra.mxu0 0.0
    %246 = vmatprep.mubr.f32.mxu0 0.0
    %247 = vmatmul.mubr.f32.gmra.mrb[0].mxu0 %v164
    %v248 = vpop.f32.mrb[0].mxu0
    %v249 = vadd.f32 0.0, %v248
    %v250 = vpop.f32.mrb[0].mxu0
    %251 = vdwg.mxu0
    %v252 = vrot.slane %v249, 4
    %v253 = vadd.f32 %v249, %v252
    %v254 = vrot.slane %v253, 2
    %v255 = vadd.f32 %v253, %v254
    %v256 = vrot.slane %v255, 1
    %v257 = vadd.f32 %v255, %v256
    %v258 = vmul.f32 %v249, %v249
    %v259 = vrot.slane %v258, 4
    %v260 = vadd.f32 %v258, %v259
    %v261 = vrot.slane %v260, 2
    %v262 = vadd.f32 %v260, %v261
    %v263 = vrot.slane %v262, 1
    %v264 = vadd.f32 %v262, %v263
    %v265 = vmul.f32 %v257, 0.125
    %v266 = vmul.f32 %v264, 0.125
    %v267 = vmul.f32 %v265, %v265
    %v268 = vsub.f32 %v266, %v267
    %v269 = vmax.f32 %v268, 0.0
    %v270 = vld [vmem:[#allocation7 + $0x2] sm:$0x1]
    %v271 = vadd.f32 %v269, 1e-05
    %v272 = vrsqrt.pop %v271
    %v273 = vmul.f32 %v270, %v272
    %v274 = vld [vmem:[#allocation7 + $0x3] sm:$0x1]
    %v275 = vmul.f32 %v265, %v273
    %v276 = vsub.f32 %v274, %v275
    %v277 = vlaneseq
    %v278 = vshrl.u32 %v277, 7
    %v279 = vsub.s32 0, %v278
    %v280 = vrot.slane %v273, %v279
    %v281 = vmul.f32 %v249, %v280
    %v282 = vlaneseq
    %v283 = vshrl.u32 %v282, 7
    %v284 = vsub.s32 0, %v283
    %v285 = vrot.slane %v276, %v284
    %v286 = vadd.f32 %v281, %v285
    %v287 = vmax.f32 %v286, 0.0
    %s288 = scalar_lea.vmem [#allocation5], 256
    %v289 = vld [vmem:[%s288] sm:$0xff]
    %v290 = vld [vmem:[%s288 + $0x8] sm:$0xff]
    %v291 = vld [vmem:[%s288 + $0x10] sm:$0xff]
    %v292 = vld [vmem:[%s288 + $0x18] sm:$0xff]
    %v293 = vld [vmem:[%s288 + $0x20] sm:$0xff]
    %v294 = vld [vmem:[%s288 + $0x28] sm:$0xff]
    %v295 = vld [vmem:[%s288 + $0x30] sm:$0xff]
    %v296 = vld [vmem:[%s288 + $0x38] sm:$0xff]
    %v297 = vld [vmem:[%s288 + $0x40] sm:$0xff]
    %v298 = vld [vmem:[%s288 + $0x48] sm:$0xff]
    %v299 = vld [vmem:[%s288 + $0x50] sm:$0xff]
    %v300 = vld [vmem:[%s288 + $0x58] sm:$0xff]
    %v301 = vld [vmem:[%s288 + $0x60] sm:$0xff]
    %v302 = vld [vmem:[%s288 + $0x68] sm:$0xff]
    %v303 = vld [vmem:[%s288 + $0x70] sm:$0xff]
    %v304 = vld [vmem:[%s288 + $0x78] sm:$0xff]
    %305 = vmatprep.subr.mxu0 0.0
    %306 = vmatpush1.msra.mxu0 %v289
    %307 = vmatprep.subr.mxu0 0.0
    %308 = vmatpush1.msra.mxu0 %v290
    %309 = vmatprep.subr.mxu0 0.0
    %310 = vmatpush1.msra.mxu0 %v291
    %311 = vmatprep.subr.mxu0 0.0
    %312 = vmatpush1.msra.mxu0 %v292
    %313 = vmatprep.subr.mxu0 0.0
    %314 = vmatpush1.msra.mxu0 %v293
    %315 = vmatprep.subr.mxu0 0.0
    %316 = vmatpush1.msra.mxu0 %v294
    %317 = vmatprep.subr.mxu0 0.0
    %318 = vmatpush1.msra.mxu0 %v295
    %319 = vmatprep.subr.mxu0 0.0
    %320 = vmatpush1.msra.mxu0 %v296
    %321 = vmatprep.subr.mxu0 0.0
    %322 = vmatpush1.msra.mxu0 %v297
    %323 = vmatprep.subr.mxu0 0.0
    %324 = vmatpush1.msra.mxu0 %v298
    %325 = vmatprep.subr.mxu0 0.0
    %326 = vmatpush1.msra.mxu0 %v299
    %327 = vmatprep.subr.mxu0 0.0
    %328 = vmatpush1.msra.mxu0 %v300
    %329 = vmatprep.subr.mxu0 0.0
    %330 = vmatpush1.msra.mxu0 %v301
    %331 = vmatprep.subr.mxu0 0.0
    %332 = vmatpush1.msra.mxu0 %v302
    %333 = vmatprep.subr.mxu0 0.0
    %334 = vmatpush1.msra.mxu0 %v303
    %335 = vmatprep.subr.mxu0 0.0
    %336 = vmatpush1.msra.mxu0 %v304
    %337 = vmatprep.subr.mxu0 0.0
    %338 = vmatpush1.msra.mxu0 0.0
    %339 = vmatprep.subr.mxu0 0.0
    %340 = vmatpush1.msra.mxu0 0.0
    %341 = vmatprep.subr.mxu0 0.0
    %342 = vmatpush1.msra.mxu0 0.0
    %343 = vmatprep.subr.mxu0 0.0
    %344 = vmatpush1.msra.mxu0 0.0
    %345 = vmatprep.subr.mxu0 0.0
    %346 = vmatpush1.msra.mxu0 0.0
    %347 = vmatprep.subr.mxu0 0.0
    %348 = vmatpush1.msra.mxu0 0.0
    %349 = vmatprep.subr.mxu0 0.0
    %350 = vmatpush1.msra.mxu0 0.0
    %351 = vmatprep.subr.mxu0 0.0
    %352 = vmatpush1.msra.mxu0 0.0
    %353 = vmatprep.subr.mxu0 0.0
    %354 = vmatpush1.msra.mxu0 0.0
    %355 = vmatprep.subr.mxu0 0.0
    %356 = vmatpush1.msra.mxu0 0.0
    %357 = vmatprep.subr.mxu0 0.0
    %358 = vmatpush1.msra.mxu0 0.0
    %359 = vmatprep.subr.mxu0 0.0
    %360 = vmatpush1.msra.mxu0 0.0
    %361 = vmatprep.subr.mxu0 0.0
    %362 = vmatpush1.msra.mxu0 0.0
    %363 = vmatprep.subr.mxu0 0.0
    %364 = vmatpush1.msra.mxu0 0.0
    %365 = vmatprep.subr.mxu0 0.0
    %366 = vmatpush1.msra.mxu0 0.0
    %367 = vmatprep.subr.mxu0 0.0
    %368 = vmatpush1.msra.mxu0 0.0
    %369 = vmatprep.mubr.f32.mxu0 0.0
    %370 = vmatmul.mubr.f32.gmra.mrb[0].mxu0 %v287
    %v371 = vpop.f32.mrb[0].mxu0
    %v372 = vadd.f32 0.0, %v371
    %v373 = vpop.f32.mrb[0].mxu0
    %374 = vdwg.mxu0
    %v375 = vrot.slane %v372, 4
    %v376 = vadd.f32 %v372, %v375
    %v377 = vrot.slane %v376, 2
    %v378 = vadd.f32 %v376, %v377
    %v379 = vrot.slane %v378, 1
    %v380 = vadd.f32 %v378, %v379
    %v381 = vmul.f32 %v372, %v372
    %v382 = vrot.slane %v381, 4
    %v383 = vadd.f32 %v381, %v382
    %v384 = vrot.slane %v383, 2
    %v385 = vadd.f32 %v383, %v384
    %v386 = vrot.slane %v385, 1
    %v387 = vadd.f32 %v385, %v386
    %v388 = vmul.f32 %v380, 0.125
    %v389 = vmul.f32 %v387, 0.125
    %v390 = vmul.f32 %v388, %v388
    %v391 = vsub.f32 %v389, %v390
    %v392 = vmax.f32 %v391, 0.0
    %v393 = vld [vmem:[#allocation7 + $0x4] sm:$0x1]
    %v394 = vadd.f32 %v392, 1e-05
    %v395 = vrsqrt.pop %v394
    %v396 = vmul.f32 %v393, %v395
    %v397 = vld [vmem:[#allocation7 + $0x5] sm:$0x1]
    %v398 = vmul.f32 %v388, %v396
    %v399 = vsub.f32 %v397, %v398
    %v400 = vlaneseq
    %v401 = vshrl.u32 %v400, 7
    %v402 = vsub.s32 0, %v401
    %v403 = vrot.slane %v396, %v402
    %v404 = vmul.f32 %v372, %v403
    %v405 = vlaneseq
    %v406 = vshrl.u32 %v405, 7
    %v407 = vsub.s32 0, %v406
    %v408 = vrot.slane %v399, %v407
    %v409 = vadd.f32 %v404, %v408
    %v410 = vmax.f32 %v409, 0.0
    %s411 = scalar_lea.vmem [#allocation5], 384
    %v412 = vld [vmem:[%s411] sm:$0xff]
    %v413 = vld [vmem:[%s411 + $0x8] sm:$0xff]
    %v414 = vld [vmem:[%s411 + $0x10] sm:$0xff]
    %v415 = vld [vmem:[%s411 + $0x18] sm:$0xff]
    %v416 = vld [vmem:[%s411 + $0x20] sm:$0xff]
    %v417 = vld [vmem:[%s411 + $0x28] sm:$0xff]
    %v418 = vld [vmem:[%s411 + $0x30] sm:$0xff]
    %v419 = vld [vmem:[%s411 + $0x38] sm:$0xff]
    %v420 = vld [vmem:[%s411 + $0x40] sm:$0xff]
    %v421 = vld [vmem:[%s411 + $0x48] sm:$0xff]
    %v422 = vld [vmem:[%s411 + $0x50] sm:$0xff]
    %v423 = vld [vmem:[%s411 + $0x58] sm:$0xff]
    %v424 = vld [vmem:[%s411 + $0x60] sm:$0xff]
    %v425 = vld [vmem:[%s411 + $0x68] sm:$0xff]
    %v426 = vld [vmem:[%s411 + $0x70] sm:$0xff]
    %v427 = vld [vmem:[%s411 + $0x78] sm:$0xff]
    %v428 = vld [vmem:[#allocation7 + $0x6] sm:$0x1]
    %v429 = vlaneseq
    %v430 = vshrl.u32 %v429, 7
    %v431 = vsub.s32 0, %v430
    %v432 = vrot.slane %v428, %v431
    %433 = vmatprep.subr.mxu0 0.0
    %434 = vmatpush1.msra.mxu0 %v412
    %435 = vmatprep.subr.mxu0 0.0
    %436 = vmatpush1.msra.mxu0 %v413
    %437 = vmatprep.subr.mxu0 0.0
    %438 = vmatpush1.msra.mxu0 %v414
    %439 = vmatprep.subr.mxu0 0.0
    %440 = vmatpush1.msra.mxu0 %v415
    %441 = vmatprep.subr.mxu0 0.0
    %442 = vmatpush1.msra.mxu0 %v416
    %443 = vmatprep.subr.mxu0 0.0
    %444 = vmatpush1.msra.mxu0 %v417
    %445 = vmatprep.subr.mxu0 0.0
    %446 = vmatpush1.msra.mxu0 %v418
    %447 = vmatprep.subr.mxu0 0.0
    %448 = vmatpush1.msra.mxu0 %v419
    %449 = vmatprep.subr.mxu0 0.0
    %450 = vmatpush1.msra.mxu0 %v420
    %451 = vmatprep.subr.mxu0 0.0
    %452 = vmatpush1.msra.mxu0 %v421
    %453 = vmatprep.subr.mxu0 0.0
    %454 = vmatpush1.msra.mxu0 %v422
    %455 = vmatprep.subr.mxu0 0.0
    %456 = vmatpush1.msra.mxu0 %v423
    %457 = vmatprep.subr.mxu0 0.0
    %458 = vmatpush1.msra.mxu0 %v424
    %459 = vmatprep.subr.mxu0 0.0
    %460 = vmatpush1.msra.mxu0 %v425
    %461 = vmatprep.subr.mxu0 0.0
    %462 = vmatpush1.msra.mxu0 %v426
    %463 = vmatprep.subr.mxu0 0.0
    %464 = vmatpush1.msra.mxu0 %v427
    %465 = vmatprep.subr.mxu0 0.0
    %466 = vmatpush1.msra.mxu0 0.0
    %467 = vmatprep.subr.mxu0 0.0
    %468 = vmatpush1.msra.mxu0 0.0
    %469 = vmatprep.subr.mxu0 0.0
    %470 = vmatpush1.msra.mxu0 0.0
    %471 = vmatprep.subr.mxu0 0.0
    %472 = vmatpush1.msra.mxu0 0.0
    %473 = vmatprep.subr.mxu0 0.0
    %474 = vmatpush1.msra.mxu0 0.0
    %475 = vmatprep.subr.mxu0 0.0
    %476 = vmatpush1.msra.mxu0 0.0
    %477 = vmatprep.subr.mxu0 0.0
    %478 = vmatpush1.msra.mxu0 0.0
    %479 = vmatprep.subr.mxu0 0.0
    %480 = vmatpush1.msra.mxu0 0.0
    %481 = vmatprep.subr.mxu0 0.0
    %482 = vmatpush1.msra.mxu0 0.0
    %483 = vmatprep.subr.mxu0 0.0
    %484 = vmatpush1.msra.mxu0 0.0
    %485 = vmatprep.subr.mxu0 0.0
    %486 = vmatpush1.msra.mxu0 0.0
    %487 = vmatprep.subr.mxu0 0.0
    %488 = vmatpush1.msra.mxu0 0.0
    %489 = vmatprep.subr.mxu0 0.0
    %490 = vmatpush1.msra.mxu0 0.0
    %491 = vmatprep.subr.mxu0 0.0
    %492 = vmatpush1.msra.mxu0 0.0
    %493 = vmatprep.subr.mxu0 0.0
    %494 = vmatpush1.msra.mxu0 0.0
    %495 = vmatprep.subr.mxu0 0.0
    %496 = vmatpush1.msra.mxu0 0.0
    %497 = vmatprep.mubr.f32.mxu0 0.0
    %498 = vmatmul.mubr.f32.gmra.mrb[0].mxu0 %v410
    %v499 = vpop.f32.mrb[0].mxu0
    %v500 = vadd.f32 %v432, %v499
    %v501 = vpop.f32.mrb[0].mxu0
    %502 = vdwg.mxu0
    %503 = vst [vmem:[#allocation8] sm:$0xff] %v500
    // Predicated region
    $region26: #{tpu_custom_call.1} parent=1 // pred_check
      _
    $region27: #{tpu_custom_call.1} parent=1 // pred_check_branch
      %505 = sbr.rel (0) target = $region29
    $region28: #{tpu_custom_call.1} parent=1 // pred_region
      %s507 = ssub.s32 128, 128
      %508 = vsyncadd [#allocation4], %s507
      %s510 = sshll.u32 [#allocation8], 4
      %s511 = int_to_ptr.vmem [resolvable:$true] %s510
      %513 = dma.vmem_to_hbm [thread:$0]  %s511, 128, %s3, [#allocation4]
    $region29: #{tpu_custom_call.1} parent=1 // pred_fallthru
      _
    // Predicated region
    $region30: #{tpu_custom_call.1} parent=1 // pred_check
      _
    $region31: #{tpu_custom_call.1} parent=1 // pred_check_branch
      %515 = sbr.rel (0) target = $region33
    $region32: #{tpu_custom_call.1} parent=1 // pred_region
      %516 = dma.done [#allocation4], 128
    $region33: #{tpu_custom_call.1} parent=1 // pred_fallthru
      _
    %517 = vsyncpa [#allocation3], 1
    %518 = vsyncpa [#allocation6], 1
    %519 = vsyncpa [#allocation4], 1

</llo_original>
